<compile_context>
chip_gen: v5e
topology: v5e:2x2
jax: 0.10.0
libtpu: 0.0.40
codegen_flags: <defaults>
</compile_context>

<pallas_src>
import functools

import jax
import jax.numpy as jnp
from jax.experimental import pallas as pl
from jax.experimental.pallas import tpu as pltpu

LANE = 128      # TPU lane width: hidden/action dims padded to a multiple of this.
SUBLANE = 8     # Batch tiles kept a multiple of the sublane count.
HIDDEN = 64
DEFAULT_MAX_TILE_B = 1024


def dqn_kernel(x_ref, w1_ref, b1_ref, w2_ref, b2_ref, w3_ref, b3_ref, out_ref):
    # One batch tile per grid step: three MXU matmuls (f32 accumulate) + bias
    # adds + ReLUs.  Bias add / ReLU stay in f32 (v5e's VPU has no bf16);
    # activations are cast back to the weight dtype only at the matmul inputs.
    f32 = jnp.float32
    x = x_ref[...]
    h1 = jnp.dot(x, w1_ref[...], preferred_element_type=f32) + b1_ref[...]
    h1 = jnp.maximum(h1, 0.0)
    h2 = (
        jnp.dot(h1.astype(w2_ref.dtype), w2_ref[...], preferred_element_type=f32)
        + b2_ref[...]
    )
    h2 = jnp.maximum(h2, 0.0)
    out_ref[...] = (
        jnp.dot(h2.astype(w3_ref.dtype), w3_ref[...], preferred_element_type=f32)
        + b3_ref[...]
    ).astype(out_ref.dtype)


def _round_up(n, m):
    return ((n + m - 1) // m) * m


def _pad2d(a, rows, cols):
    return jnp.pad(a, ((0, rows - a.shape[0]), (0, cols - a.shape[1])))


def prepare_params(params, compute_dtype=jnp.float32):
    """Pad + cast parameters ONCE (outside the per-forward-call path).

    params: unpadded (w1, b1, w2, b2, w3, b3), weights (in_features, out_features),
    biases (1, out_features).  Weights are cast to `compute_dtype` (bf16 halves
    resident VMEM + DMA bytes on v6e/v7x); biases stay f32 for the f32 epilogue.
    """
    w1, b1, w2, b2, w3, b3 = params
    S, H = w1.shape
    A = w3.shape[1]
    Hp = _round_up(max(H, LANE), LANE)
    Ap = _round_up(max(A, LANE), LANE)
    f32 = jnp.float32
    padded = (
        _pad2d(w1.astype(f32), S, Hp).astype(compute_dtype),   # state dim NOT padded
        _pad2d(b1.astype(f32), 1, Hp),
        _pad2d(w2.astype(f32), Hp, Hp).astype(compute_dtype),
        _pad2d(b2.astype(f32), 1, Hp),
        _pad2d(w3.astype(f32), Hp, Ap).astype(compute_dtype),
        _pad2d(b3.astype(f32), 1, Ap),
    )
    return padded, (S, H, A)


def _pick_tile(batch, max_tile_b):
    bp8 = _round_up(max(batch, SUBLANE), SUBLANE)
    if bp8 <= max_tile_b:
        if bp8 >= 512:
            # Split into two balanced steps so the "parallel" grid axis can
            # shard across v7x's two TensorCores; on v5e/v6e the extra step
            # costs only ~0.35 us.
            return _round_up(-(-bp8 // 2), SUBLANE)
        return bp8  # single grid step: no per-step overhead at all
    return max_tile_b


def dqn_forward(x, padded_params, *, action_size, hidden=HIDDEN,
                max_tile_b=DEFAULT_MAX_TILE_B):
    """Forward pass of the DQN MLP via one pallas_call.

    x: (B, state_size) float32.  padded_params: output of prepare_params.
    Returns (B, action_size) float32.
    """
    w1p, b1p, w2p, b2p, w3p, b3p = padded_params
    B, S = x.shape
    Hp = w1p.shape[1]
    Ap = w3p.shape[1]

    tile_b = _pick_tile(B, max_tile_b)
    Bp = _round_up(B, tile_b)
    grid = (Bp // tile_b,)

    # Only the batch dim of x is padded (to a tile multiple); no lane padding.
    xp = x.astype(w1p.dtype)
    if Bp != B:
        xp = jnp.pad(xp, ((0, Bp - B), (0, 0)))

    # Weights / biases: same block for every grid step -> stay VMEM-resident.
    resident = lambda shape: pl.BlockSpec(shape, lambda i: (0, 0))

    # Cost estimate on REAL (unpadded) dims so XLA schedules this call sanely.
    act_bytes = xp.dtype.itemsize
    flops = 2 * B * (S * hidden + hidden * hidden + hidden * action_size)
    bytes_accessed = int(
        act_bytes * (B * S + S * hidden + hidden * hidden + hidden * action_size)
        + 4 * (2 * hidden + action_size)      # biases (f32)
        + 4 * B * action_size                 # real output payload
    )

    out_padded = pl.pallas_call(
        dqn_kernel,
        out_shape=jax.ShapeDtypeStruct((Bp, Ap), jnp.float32),
        grid=grid,
        in_specs=[
            pl.BlockSpec((tile_b, S), lambda i: (i, 0)),  # activations: pipelined
            resident((S, Hp)), resident((1, Hp)),
            resident((Hp, Hp)), resident((1, Hp)),
            resident((Hp, Ap)), resident((1, Ap)),
        ],
        out_specs=pl.BlockSpec((tile_b, Ap), lambda i: (i, 0)),
        compiler_params=pltpu.CompilerParams(
            dimension_semantics=("parallel",),
        ),
        cost_estimate=pl.CostEstimate(
            flops=flops, transcendentals=0, bytes_accessed=bytes_accessed
        ),
    )(xp, w1p, b1p, w2p, b2p, w3p, b3p)

    # Slice away batch padding and padded action lanes.
    return out_padded[:B, :action_size]


def init_params(key, state_size, action_size, hidden=HIDDEN):
    # Deterministic init mimicking torch.nn.Linear: U(-1/sqrt(fan_in), +1/sqrt(fan_in)).
    def linear(k, fan_in, fan_out):
        kw, kb = jax.random.split(k)
        bound = 1.0 / jnp.sqrt(jnp.float32(fan_in))
        w = jax.random.uniform(kw, (fan_in, fan_out), jnp.float32, -bound, bound)
        b = jax.random.uniform(kb, (1, fan_out), jnp.float32, -bound, bound)
        return w, b

    k1, k2, k3 = jax.random.split(key, 3)
    w1, b1 = linear(k1, state_size, hidden)
    w2, b2 = linear(k2, hidden, hidden)
    w3, b3 = linear(k3, hidden, action_size)
    return (w1, b1, w2, b2, w3, b3)


def reference_forward(x, params):
    w1, b1, w2, b2, w3, b3 = params
    h1 = jnp.maximum(x @ w1 + b1, 0.0)
    h2 = jnp.maximum(h1 @ w2 + b2, 0.0)
    return h2 @ w3 + b3


if __name__ == "__main__":
    key = jax.random.PRNGKey(0)
    k_x1, k_x2, k_x3, k_p = jax.random.split(key, 4)

    state_size, action_size = 16, 4
    params = init_params(k_p, state_size, action_size)

    # Pad/cast parameters ONCE, outside the jitted per-call path.
    params_f32, _ = prepare_params(params, jnp.float32)
    params_bf16, _ = prepare_params(params, jnp.bfloat16)

    fwd = jax.jit(functools.partial(dqn_forward, action_size=action_size))

    # Case 1: tiny act-step batch -> single 8-row grid step, f32.
    x1 = jax.random.normal(k_x1, (8, state_size), jnp.float32)
    out1 = jax.block_until_ready(fwd(x1, params_f32))
    ref1 = reference_forward(x1, params)
    assert out1.shape == (8, action_size)
    assert jnp.allclose(out1, ref1, atol=2e-5, rtol=1e-5), "mismatch (B=8, f32)"

    # Case 2: replay minibatch, batch not a multiple of 8 -> exercises the
    # batch-padding path while still collapsing to a single grid step.
    x2 = jax.random.normal(k_x2, (203, state_size), jnp.float32)
    out2 = jax.block_until_ready(fwd(x2, params_f32))
    ref2 = reference_forward(x2, params)
    assert out2.shape == (203, action_size)
    assert jnp.allclose(out2, ref2, atol=2e-5, rtol=1e-5), "mismatch (B=203, f32)"

    # Case 3: large replay batch with the bf16 (v6e/v7x) weight path ->
    # 2-step "parallel" grid with batch padding; looser tolerance because the
    # matmul inputs are bf16 (accumulation stays f32).
    x3 = jax.random.normal(k_x3, (2000, state_size), jnp.float32)
    out3 = jax.block_until_ready(fwd(x3, params_bf16))
    ref3 = reference_forward(x3, params)
    assert out3.shape == (2000, action_size)
    assert jnp.allclose(out3, ref3, atol=5e-2, rtol=5e-2), "mismatch (B=2000, bf16)"

    print("KERNEL_OK")
</pallas_src>

<mosaic_0001>
module attributes {stable_mosaic.version = 11 : i64} {
  func.func @dqn_kernel(%arg0: i32, %arg1: memref<8x16xf32, #tpu.memory_space<vmem>>, %arg2: memref<16x128xf32, #tpu.memory_space<vmem>>, %arg3: memref<1x128xf32, #tpu.memory_space<vmem>>, %arg4: memref<128x128xf32, #tpu.memory_space<vmem>>, %arg5: memref<1x128xf32, #tpu.memory_space<vmem>>, %arg6: memref<128x128xf32, #tpu.memory_space<vmem>>, %arg7: memref<1x128xf32, #tpu.memory_space<vmem>>, %arg8: memref<8x128xf32, #tpu.memory_space<vmem>>) attributes {dimension_semantics = [#tpu.dimension_semantics<parallel>], iteration_bounds = array<i64: 1>, scalar_prefetch = 0 : i64, scratch_operands = 0 : i64, tpu.core_type = #tpu.core_type<tc>, window_params = [{transform_indices = @transform_0, window_bounds = array<i64: 8, 16>}, {pipeline_mode = #tpu.pipeline_mode<synchronous>, transform_indices = @transform_1, window_bounds = array<i64: 16, 128>}, {pipeline_mode = #tpu.pipeline_mode<synchronous>, transform_indices = @transform_2, window_bounds = array<i64: 1, 128>}, {pipeline_mode = #tpu.pipeline_mode<synchronous>, transform_indices = @transform_3, window_bounds = array<i64: 128, 128>}, {pipeline_mode = #tpu.pipeline_mode<synchronous>, transform_indices = @transform_4, window_bounds = array<i64: 1, 128>}, {pipeline_mode = #tpu.pipeline_mode<synchronous>, transform_indices = @transform_5, window_bounds = array<i64: 128, 128>}, {pipeline_mode = #tpu.pipeline_mode<synchronous>, transform_indices = @transform_6, window_bounds = array<i64: 1, 128>}, {transform_indices = @transform_7, window_bounds = array<i64: 8, 128>}]} {
    %c0 = arith.constant 0 : index
    %c0_0 = arith.constant 0 : index
    %0 = vector.load %arg1[%c0, %c0_0] : memref<8x16xf32, #tpu.memory_space<vmem>>, vector<8x16xf32>
    %c0_1 = arith.constant 0 : index
    %c0_2 = arith.constant 0 : index
    %1 = vector.load %arg2[%c0_1, %c0_2] : memref<16x128xf32, #tpu.memory_space<vmem>>, vector<16x128xf32>
    %cst = arith.constant dense<0.000000e+00> : vector<8x128xf32>
    %2 = tpu.matmul %0, %1, %cst {dimension_numbers = #tpu.dot_dimension_numbers<[1], [0], [0], [1], [0, 0, 1, 1], [], []>} : vector<8x16xf32>, vector<16x128xf32>, vector<8x128xf32> -> vector<8x128xf32>
    %c0_3 = arith.constant 0 : index
    %c0_4 = arith.constant 0 : index
    %3 = vector.load %arg3[%c0_3, %c0_4] : memref<1x128xf32, #tpu.memory_space<vmem>>, vector<1x128xf32>
    %4 = vector.broadcast %3 : vector<1x128xf32> to vector<8x128xf32>
    %5 = arith.addf %2, %4 : vector<8x128xf32>
    %cst_5 = arith.constant 0.000000e+00 : f32
    %6 = vector.broadcast %cst_5 : f32 to vector<8x128xf32>
    %7 = arith.maximumf %5, %6 : vector<8x128xf32>
    %c0_6 = arith.constant 0 : index
    %c0_7 = arith.constant 0 : index
    %8 = vector.load %arg4[%c0_6, %c0_7] : memref<128x128xf32, #tpu.memory_space<vmem>>, vector<128x128xf32>
    %cst_8 = arith.constant dense<0.000000e+00> : vector<8x128xf32>
    %9 = tpu.matmul %7, %8, %cst_8 {dimension_numbers = #tpu.dot_dimension_numbers<[1], [0], [0], [1], [0, 0, 1, 1], [], []>} : vector<8x128xf32>, vector<128x128xf32>, vector<8x128xf32> -> vector<8x128xf32>
    %c0_9 = arith.constant 0 : index
    %c0_10 = arith.constant 0 : index
    %10 = vector.load %arg5[%c0_9, %c0_10] : memref<1x128xf32, #tpu.memory_space<vmem>>, vector<1x128xf32>
    %11 = vector.broadcast %10 : vector<1x128xf32> to vector<8x128xf32>
    %12 = arith.addf %9, %11 : vector<8x128xf32>
    %cst_11 = arith.constant 0.000000e+00 : f32
    %13 = vector.broadcast %cst_11 : f32 to vector<8x128xf32>
    %14 = arith.maximumf %12, %13 : vector<8x128xf32>
    %c0_12 = arith.constant 0 : index
    %c0_13 = arith.constant 0 : index
    %15 = vector.load %arg6[%c0_12, %c0_13] : memref<128x128xf32, #tpu.memory_space<vmem>>, vector<128x128xf32>
    %cst_14 = arith.constant dense<0.000000e+00> : vector<8x128xf32>
    %16 = tpu.matmul %14, %15, %cst_14 {dimension_numbers = #tpu.dot_dimension_numbers<[1], [0], [0], [1], [0, 0, 1, 1], [], []>} : vector<8x128xf32>, vector<128x128xf32>, vector<8x128xf32> -> vector<8x128xf32>
    %c0_15 = arith.constant 0 : index
    %c0_16 = arith.constant 0 : index
    %17 = vector.load %arg7[%c0_15, %c0_16] : memref<1x128xf32, #tpu.memory_space<vmem>>, vector<1x128xf32>
    %18 = vector.broadcast %17 : vector<1x128xf32> to vector<8x128xf32>
    %19 = arith.addf %16, %18 : vector<8x128xf32>
    %c0_17 = arith.constant 0 : index
    %c0_18 = arith.constant 0 : index
    %20 = vector.load %arg8[%c0_17, %c0_18] : memref<8x128xf32, #tpu.memory_space<vmem>>, vector<8x128xf32>
    tpu.vector_store %arg8[%c0_17, %c0_18], %19 {strides = array<i32>} : memref<8x128xf32, #tpu.memory_space<vmem>>, vector<8x128xf32>,
    return
  }
  func.func @transform_0(%arg0: i32) -> (i32, i32) {
    %c0_i32 = arith.constant 0 : i32
    %c0_i32_0 = arith.constant 0 : i32
    return %arg0, %c0_i32 : i32, i32
  }
  func.func @transform_1(%arg0: i32) -> (i32, i32) {
    %c0_i32 = arith.constant 0 : i32
    %c0_i32_0 = arith.constant 0 : i32
    %c0_i32_1 = arith.constant 0 : i32
    return %c0_i32, %c0_i32_0 : i32, i32
  }
  func.func @transform_2(%arg0: i32) -> (i32, i32) {
    %c0_i32 = arith.constant 0 : i32
    %c0_i32_0 = arith.constant 0 : i32
    %c0_i32_1 = arith.constant 0 : i32
    return %c0_i32, %c0_i32_0 : i32, i32
  }
  func.func @transform_3(%arg0: i32) -> (i32, i32) {
    %c0_i32 = arith.constant 0 : i32
    %c0_i32_0 = arith.constant 0 : i32
    %c0_i32_1 = arith.constant 0 : i32
    return %c0_i32, %c0_i32_0 : i32, i32
  }
  func.func @transform_4(%arg0: i32) -> (i32, i32) {
    %c0_i32 = arith.constant 0 : i32
    %c0_i32_0 = arith.constant 0 : i32
    %c0_i32_1 = arith.constant 0 : i32
    return %c0_i32, %c0_i32_0 : i32, i32
  }
  func.func @transform_5(%arg0: i32) -> (i32, i32) {
    %c0_i32 = arith.constant 0 : i32
    %c0_i32_0 = arith.constant 0 : i32
    %c0_i32_1 = arith.constant 0 : i32
    return %c0_i32, %c0_i32_0 : i32, i32
  }
  func.func @transform_6(%arg0: i32) -> (i32, i32) {
    %c0_i32 = arith.constant 0 : i32
    %c0_i32_0 = arith.constant 0 : i32
    %c0_i32_1 = arith.constant 0 : i32
    return %c0_i32, %c0_i32_0 : i32, i32
  }
  func.func @transform_7(%arg0: i32) -> (i32, i32) {
    %c0_i32 = arith.constant 0 : i32
    %c0_i32_0 = arith.constant 0 : i32
    return %arg0, %c0_i32 : i32, i32
  }
}

</mosaic_0001>

<llo_original>
// kernel: dqn_forward.1
$region0: #{dqn_forward.1}
  #allocation0 [shape = 'u32[]', space=smem, size = 0x4, offset = 0x4, fixed_abs, tag = 'smem constant byte address 0x4 - core index']
  #allocation1 [shape = 'u32[72,128]{1,0:T(1,128)}', space=vmem, size = 0x9000, scoped, tag = 'internal scratch']
  %s0 = inlined_call_operand.hbm [shape: f32[8,16], index: 0, kind: input, shape index: {}]
  %s1 = inlined_call_operand.hbm [shape: f32[16,128], index: 1, kind: input, shape index: {}]
  %s2 = inlined_call_operand.vmem [shape: f32[1,128], index: 2, kind: input, shape index: {}]
  %s3 = inlined_call_operand.hbm [shape: f32[128,128], index: 3, kind: input, shape index: {}]
  %s4 = inlined_call_operand.vmem [shape: f32[1,128], index: 4, kind: input, shape index: {}]
  %s5 = inlined_call_operand.hbm [shape: f32[128,128], index: 5, kind: input, shape index: {}]
  %s6 = inlined_call_operand.vmem [shape: f32[1,128], index: 6, kind: input, shape index: {}]
  %s7 = inlined_call_operand.vmem [shape: f32[8,128], index: 7, kind: output, shape index: {}]
  %s8 = sld [smem:[#allocation0]]
  $region54: #{dqn_forward.1} parent=0
    _
  %s10 = ssub.s32 1, %s8
  %s11 = scalar_select 0, %s10, %s8
  $region1: #{dqn_forward.1} parent=0
    #allocation2 [shape = 'u8[4096]{0}', space=vmem, size = 0x1000, scoped, tag = 'input window, operand 0, single buffered']
    #allocation3 [shape = 's32[1]{0}', space=sflag, size = 0x4, scoped, tag = 'scoped memory for dqn_forward.1']
    #allocation4 [shape = 'u8[8192]{0}', space=vmem, size = 0x2000, scoped, tag = 'input window, operand 1, single buffered']
    #allocation5 [shape = 's32[1]{0}', space=sflag, size = 0x4, scoped, tag = 'scoped memory for dqn_forward.1']
    #allocation6 [shape = 'u8[65536]{0}', space=vmem, size = 0x10000, scoped, tag = 'input window, operand 3, single buffered']
    #allocation7 [shape = 'u8[65536]{0}', space=vmem, size = 0x10000, scoped, tag = 'input window, operand 5, single buffered']
    #allocation8 [shape = 's32[1]{0}', space=sflag, size = 0x4, scoped, tag = 'scoped memory for dqn_forward.1']
    %12 = vsyncpa [#allocation3], 0
    %13 = vsyncpa [#allocation5], 0
    %14 = vsyncpa [#allocation8], 0
    // Predicated region
    $region2: #{dqn_forward.1} parent=1 // pred_check
      _
    $region3: #{dqn_forward.1} parent=1 // pred_check_branch
      %16 = sbr.rel (0) target = $region5
    $region4: #{dqn_forward.1} parent=1 // pred_region
      %18 = vsyncadd [#allocation3], 0
      %s20 = sshll.u32 %s0, 4
      %s21 = int_to_ptr.hbm [resolvable:$true] %s20
      %s22 = sshll.u32 [#allocation2], 4
      %s23 = int_to_ptr.vmem [resolvable:$true] %s22
      %25 = dma.hbm_to_vmem [thread:$0]  %s21, 128, %s23, [#allocation3]
    $region5: #{dqn_forward.1} parent=1 // pred_fallthru
      _
    // Predicated region
    $region6: #{dqn_forward.1} parent=1 // pred_check
      _
    $region7: #{dqn_forward.1} parent=1 // pred_check_branch
      %27 = sbr.rel (0) target = $region9
    $region8: #{dqn_forward.1} parent=1 // pred_region
      %29 = vsyncadd [#allocation5], 0
      %s30 = sshll.u32 %s1, 4
      %s31 = int_to_ptr.hbm [resolvable:$true] %s30
      %s32 = sshll.u32 [#allocation4], 4
      %s33 = int_to_ptr.vmem [resolvable:$true] %s32
      %38 = dma.hbm_to_vmem [thread:$0]  %s31, 256, %s33, [#allocation5], 128, 128, 8
    $region9: #{dqn_forward.1} parent=1 // pred_fallthru
      _
    // Predicated region
    $region10: #{dqn_forward.1} parent=1 // pred_check
      _
    $region11: #{dqn_forward.1} parent=1 // pred_check_branch
      %40 = sbr.rel (0) target = $region13
    $region12: #{dqn_forward.1} parent=1 // pred_region
      _
    $region13: #{dqn_forward.1} parent=1 // pred_fallthru
      _
    // Predicated region
    $region14: #{dqn_forward.1} parent=1 // pred_check
      _
    $region15: #{dqn_forward.1} parent=1 // pred_check_branch
      %42 = sbr.rel (0) target = $region17
    $region16: #{dqn_forward.1} parent=1 // pred_region
      %44 = vsyncadd [#allocation5], 0
      %s45 = sshll.u32 %s3, 4
      %s46 = int_to_ptr.hbm [resolvable:$true] %s45
      %s47 = sshll.u32 [#allocation6], 4
      %s48 = int_to_ptr.vmem [resolvable:$true] %s47
      %53 = dma.hbm_to_vmem [thread:$0]  %s46, 2048, %s48, [#allocation5], 128, 128, 8
    $region17: #{dqn_forward.1} parent=1 // pred_fallthru
      _
    // Predicated region
    $region18: #{dqn_forward.1} parent=1 // pred_check
      _
    $region19: #{dqn_forward.1} parent=1 // pred_check_branch
      %55 = sbr.rel (0) target = $region21
    $region20: #{dqn_forward.1} parent=1 // pred_region
      _
    $region21: #{dqn_forward.1} parent=1 // pred_fallthru
      _
    // Predicated region
    $region22: #{dqn_forward.1} parent=1 // pred_check
      _
    $region23: #{dqn_forward.1} parent=1 // pred_check_branch
      %57 = sbr.rel (0) target = $region25
    $region24: #{dqn_forward.1} parent=1 // pred_region
      %59 = vsyncadd [#allocation8], 0
      %s60 = sshll.u32 %s5, 4
      %s61 = int_to_ptr.hbm [resolvable:$true] %s60
      %s62 = sshll.u32 [#allocation7], 4
      %s63 = int_to_ptr.vmem [resolvable:$true] %s62
      %68 = dma.hbm_to_vmem [thread:$0]  %s61, 2048, %s63, [#allocation8], 128, 128, 8
    $region25: #{dqn_forward.1} parent=1 // pred_fallthru
      _
    // Predicated region
    $region26: #{dqn_forward.1} parent=1 // pred_check
      _
    $region27: #{dqn_forward.1} parent=1 // pred_check_branch
      %70 = sbr.rel (0) target = $region29
    $region28: #{dqn_forward.1} parent=1 // pred_region
      _
    $region29: #{dqn_forward.1} parent=1 // pred_fallthru
      _
    // Predicated region
    $region30: #{dqn_forward.1} parent=1 // pred_check
      _
    $region31: #{dqn_forward.1} parent=1 // pred_check_branch
      %72 = sbr.rel (0) target = $region33
    $region32: #{dqn_forward.1} parent=1 // pred_region
      %74 = dma.done [#allocation3], 128
    $region33: #{dqn_forward.1} parent=1 // pred_fallthru
      _
    // Predicated region
    $region34: #{dqn_forward.1} parent=1 // pred_check
      _
    $region35: #{dqn_forward.1} parent=1 // pred_check_branch
      %76 = sbr.rel (0) target = $region37
    $region36: #{dqn_forward.1} parent=1 // pred_region
      %78 = dma.done [#allocation5], 256
    $region37: #{dqn_forward.1} parent=1 // pred_fallthru
      _
    // Predicated region
    $region38: #{dqn_forward.1} parent=1 // pred_check
      _
    $region39: #{dqn_forward.1} parent=1 // pred_check_branch
      %80 = sbr.rel (0) target = $region41
    $region40: #{dqn_forward.1} parent=1 // pred_region
      %82 = dma.done [#allocation5], 2048
    $region41: #{dqn_forward.1} parent=1 // pred_fallthru
      _
    // Predicated region
    $region42: #{dqn_forward.1} parent=1 // pred_check
      _
    $region43: #{dqn_forward.1} parent=1 // pred_check_branch
      %84 = sbr.rel (0) target = $region45
    $region44: #{dqn_forward.1} parent=1 // pred_region
      %86 = dma.done [#allocation8], 2048
    $region45: #{dqn_forward.1} parent=1 // pred_fallthru
      _
    %v87 = vld [vmem:[#allocation2] sm:$0xff]
    %v88 = vld [vmem:[#allocation4] sm:$0xff]
    %v89 = vld [vmem:[#allocation4 + $0x8] sm:$0xff]
    %v90 = vld [vmem:[%s2] sm:$0x1]
    %v92 = vperm.slane %v90, 0
    %vm94 = vcmask 130048
    %v96 = vsel %vm94, %v87, 0
    %98 = vmatpush.msra.mxu0 0.0
    %99 = vmatpush.msra.mxu0 0.0
    %100 = vmatpush.msra.mxu0 0.0
    %101 = vmatpush.msra.mxu0 0.0
    %102 = vmatpush.msra.mxu0 0.0
    %103 = vmatpush.msra.mxu0 0.0
    %104 = vmatpush.msra.mxu0 0.0
    %105 = vmatpush.msra.mxu0 0.0
    %106 = vmatpush.msra.mxu0 0.0
    %107 = vmatpush.msra.mxu0 0.0
    %108 = vmatpush.msra.mxu0 0.0
    %109 = vmatpush.msra.mxu0 0.0
    %110 = vmatpush.msra.mxu0 0.0
    %111 = vmatpush.msra.mxu0 0.0
    %112 = vmatpush.msra.mxu0 %v89
    %113 = vmatpush.msra.mxu0 %v88
    %114 = vmatmul.f32.gmra.mxu0 %v96
    %v115 = vpop.f32.mrf.mxu0
    %v116 = vadd.f32 %v92, %v115
    %117 = vdwg.mxu0
    %v118 = vmax.f32 %v116, 0.0
    %v119 = vld [vmem:[#allocation6] sm:$0xff]
    %v120 = vld [vmem:[#allocation6 + $0x8] sm:$0xff]
    %v121 = vld [vmem:[#allocation6 + $0x10] sm:$0xff]
    %v122 = vld [vmem:[#allocation6 + $0x18] sm:$0xff]
    %v123 = vld [vmem:[#allocation6 + $0x20] sm:$0xff]
    %v124 = vld [vmem:[#allocation6 + $0x28] sm:$0xff]
    %v125 = vld [vmem:[#allocation6 + $0x30] sm:$0xff]
    %v126 = vld [vmem:[#allocation6 + $0x38] sm:$0xff]
    %v127 = vld [vmem:[#allocation6 + $0x40] sm:$0xff]
    %v128 = vld [vmem:[#allocation6 + $0x48] sm:$0xff]
    %v129 = vld [vmem:[#allocation6 + $0x50] sm:$0xff]
    %v130 = vld [vmem:[#allocation6 + $0x58] sm:$0xff]
    %v131 = vld [vmem:[#allocation6 + $0x60] sm:$0xff]
    %v132 = vld [vmem:[#allocation6 + $0x68] sm:$0xff]
    %v133 = vld [vmem:[#allocation6 + $0x70] sm:$0xff]
    %v134 = vld [vmem:[#allocation6 + $0x78] sm:$0xff]
    %v135 = vld [vmem:[%s4] sm:$0x1]
    %v137 = vperm.slane %v135, 0
    %139 = vmatpush.msra.mxu0 %v134
    %140 = vmatpush.msra.mxu0 %v133
    %141 = vmatpush.msra.mxu0 %v132
    %142 = vmatpush.msra.mxu0 %v131
    %143 = vmatpush.msra.mxu0 %v130
    %144 = vmatpush.msra.mxu0 %v129
    %145 = vmatpush.msra.mxu0 %v128
    %146 = vmatpush.msra.mxu0 %v127
    %147 = vmatpush.msra.mxu0 %v126
    %148 = vmatpush.msra.mxu0 %v125
    %149 = vmatpush.msra.mxu0 %v124
    %150 = vmatpush.msra.mxu0 %v123
    %151 = vmatpush.msra.mxu0 %v122
    %152 = vmatpush.msra.mxu0 %v121
    %153 = vmatpush.msra.mxu0 %v120
    %154 = vmatpush.msra.mxu0 %v119
    %155 = vmatmul.f32.gmra.mxu0 %v118
    %v156 = vpop.f32.mrf.mxu0
    %v157 = vadd.f32 %v137, %v156
    %158 = vdwg.mxu0
    %v159 = vmax.f32 %v157, 0.0
    %v160 = vld [vmem:[#allocation7] sm:$0xff]
    %v161 = vld [vmem:[#allocation7 + $0x8] sm:$0xff]
    %v162 = vld [vmem:[#allocation7 + $0x10] sm:$0xff]
    %v163 = vld [vmem:[#allocation7 + $0x18] sm:$0xff]
    %v164 = vld [vmem:[#allocation7 + $0x20] sm:$0xff]
    %v165 = vld [vmem:[#allocation7 + $0x28] sm:$0xff]
    %v166 = vld [vmem:[#allocation7 + $0x30] sm:$0xff]
    %v167 = vld [vmem:[#allocation7 + $0x38] sm:$0xff]
    %v168 = vld [vmem:[#allocation7 + $0x40] sm:$0xff]
    %v169 = vld [vmem:[#allocation7 + $0x48] sm:$0xff]
    %v170 = vld [vmem:[#allocation7 + $0x50] sm:$0xff]
    %v171 = vld [vmem:[#allocation7 + $0x58] sm:$0xff]
    %v172 = vld [vmem:[#allocation7 + $0x60] sm:$0xff]
    %v173 = vld [vmem:[#allocation7 + $0x68] sm:$0xff]
    %v174 = vld [vmem:[#allocation7 + $0x70] sm:$0xff]
    %v175 = vld [vmem:[#allocation7 + $0x78] sm:$0xff]
    %v176 = vld [vmem:[%s6] sm:$0x1]
    %v178 = vperm.slane %v176, 0
    %180 = vmatpush.msra.mxu0 %v175
    %181 = vmatpush.msra.mxu0 %v174
    %182 = vmatpush.msra.mxu0 %v173
    %183 = vmatpush.msra.mxu0 %v172
    %184 = vmatpush.msra.mxu0 %v171
    %185 = vmatpush.msra.mxu0 %v170
    %186 = vmatpush.msra.mxu0 %v169
    %187 = vmatpush.msra.mxu0 %v168
    %188 = vmatpush.msra.mxu0 %v167
    %189 = vmatpush.msra.mxu0 %v166
    %190 = vmatpush.msra.mxu0 %v165
    %191 = vmatpush.msra.mxu0 %v164
    %192 = vmatpush.msra.mxu0 %v163
    %193 = vmatpush.msra.mxu0 %v162
    %194 = vmatpush.msra.mxu0 %v161
    %195 = vmatpush.msra.mxu0 %v160
    %196 = vmatmul.f32.gmra.mxu0 %v159
    %v197 = vpop.f32.mrf.mxu0
    %v198 = vadd.f32 %v178, %v197
    %199 = vdwg.mxu0
    %200 = vst [vmem:[%s7] sm:$0xff] %v198
    // Predicated region
    $region46: #{dqn_forward.1} parent=1 // pred_check
      _
    $region47: #{dqn_forward.1} parent=1 // pred_check_branch
      %202 = sbr.rel (0) target = $region49
    $region48: #{dqn_forward.1} parent=1 // pred_region
      _
    $region49: #{dqn_forward.1} parent=1 // pred_fallthru
      _
    // Predicated region
    $region50: #{dqn_forward.1} parent=1 // pred_check
      _
    $region51: #{dqn_forward.1} parent=1 // pred_check_branch
      %204 = sbr.rel (0) target = $region53
    $region52: #{dqn_forward.1} parent=1 // pred_region
      _
    $region53: #{dqn_forward.1} parent=1 // pred_fallthru
      _
    %205 = vsyncpa [#allocation3], 1
    %206 = vsyncpa [#allocation5], 1
    %207 = vsyncpa [#allocation8], 1

</llo_original>
